<compile_context>
chip_gen: v7x
topology: tpu7x:2x2x1
jax: 0.10.0
libtpu: 0.0.40
codegen_flags: <defaults>
</compile_context>

<pallas_src>
import math

import jax
import jax.numpy as jnp
from jax.experimental import pallas as pl
from jax.experimental.pallas import tpu as pltpu


def _attention_kernel(x_ref, w_ref, out_ref):
    # x_ref   : (TB, S, V)  batch tile of inputs (native dtype)
    # w_ref   : (1, V)      fused projection vector (ctx^T @ W), f32
    # out_ref : (TB, V)
    xf = x_ref[...].astype(jnp.float32)                    # (TB, S, V)
    w = w_ref[...]                                          # (1, V) -> implicit bcast

    # Logits: VPU multiply + lane reduce over V (no tiny M=1 MXU matmul).
    logits = jnp.sum(xf * w, axis=-1)                       # (TB, S), f32

    # Numerically stable softmax over S (lane axis of the 2-D logits).
    m = jnp.max(logits, axis=-1, keepdims=True)             # (TB, 1)
    p = jnp.exp(logits - m)                                  # (TB, S), f32 (EUP)
    l = jnp.sum(p, axis=-1, keepdims=True)                   # (TB, 1)

    # Weighted sum over S: VPU multiply + sublane reduce; p stays f32.
    acc = jnp.sum(p[:, :, None] * xf, axis=1)                # (TB, V), f32

    out_ref[...] = (acc / l).astype(out_ref.dtype)           # exact normalization


def _vmem_capacity_bytes():
    """Per-chip VMEM capacity (fallback: conservative 64 MiB = v7x)."""
    try:
        info = pltpu.get_tpu_info()
        cap = getattr(info, "vmem_capacity_bytes", None)
        if cap:
            return int(cap)
    except Exception:
        pass
    return 64 * 1024 * 1024


def _pick_batch_tile(B, S, V, itemsize, x_tile_budget):
    """Choose (TB, padded_B).

    Tile bytes are computed with physical lane (128) / sublane padding so the
    estimate holds even when V << 128.  For B > 8 we force >= 2 grid steps
    (both v7x TensorCores get work) and round TB to a multiple of 8 so the
    (TB, V) output block obeys the sublane constraint; B is padded to a
    multiple of TB so awkward batch sizes never degrade to 1-row steps.
    """
    v_pad = -(-V // 128) * 128
    sub = {4: 8, 2: 16, 1: 32}.get(itemsize, 8)
    s_pad = -(-S // sub) * sub
    row_bytes = s_pad * v_pad * itemsize                     # physical bytes / batch row
    tb_cap = max(1, x_tile_budget // row_bytes)

    if B <= 8 and B <= tb_cap:
        return B, B                                          # single full-array tile

    n_steps = max(2, -(-B // tb_cap))
    tb = -(-B // n_steps)
    tb = -(-tb // 8) * 8                                     # multiple of 8
    cap8 = max(8, (tb_cap // 8) * 8)
    tb = max(8, min(tb, cap8))
    b_pad = -(-B // tb) * tb
    return tb, b_pad


def dot_product_attention(x, weight, bias, context):
    """x: (B, S, V); weight: (A, V); bias: (A,); context: (A, 1) -> (B, V)."""
    B, S, V = x.shape
    A = weight.shape[0]
    itemsize = jnp.dtype(x.dtype).itemsize

    # Exact fusion: (x W^T + b) @ ctx == x @ (W^T ctx) + (b @ ctx); the second
    # term is constant over the softmax axis and therefore dropped.
    w_eff = jnp.dot(context.reshape(1, A).astype(jnp.float32),
                    weight.astype(jnp.float32))              # (1, V), f32
    del bias  # exact no-op under softmax shift-invariance

    cap = _vmem_capacity_bytes()
    # Per-buffer x budget: double-buffered input plus two f32 elementwise
    # intermediates must stay comfortably under VMEM on every generation.
    mult = 2 + 2 * max(1, 4 // itemsize)
    x_tile_budget = max(512 * 1024, int(cap * 0.6) // mult)
    tb, b_pad = _pick_batch_tile(B, S, V, itemsize, x_tile_budget)

    if b_pad != B:
        x = jnp.pad(x, ((0, b_pad - B), (0, 0), (0, 0)))

    # TODO(synk): for V << 128 a wrapper-side lane repack ((B, S//k, k*V),
    # k = 128 // V) would recover ~4x vector/VMEM utilization; skipped since
    # the kernel is HBM-bound and the repack complicates the reductions.

    grid = (b_pad // tb,)
    out = pl.pallas_call(
        _attention_kernel,
        out_shape=jax.ShapeDtypeStruct((b_pad, V), x.dtype),
        grid_spec=pltpu.PrefetchScalarGridSpec(
            num_scalar_prefetch=0,
            grid=grid,
            in_specs=[
                pl.BlockSpec((tb, S, V), lambda b: (b, 0, 0)),   # x batch tile
                pl.BlockSpec((1, V), lambda b: (0, 0)),          # fused weight
            ],
            out_specs=pl.BlockSpec((tb, V), lambda b: (b, 0)),   # lane-dense slab
        ),
        compiler_params=pltpu.CompilerParams(
            dimension_semantics=("parallel",),       # batch shards across TCs
            vmem_limit_bytes=int(cap * 0.75),        # ~48 MiB v7x / ~96 MiB v5e,v6e
        ),
        cost_estimate=pl.CostEstimate(
            flops=4 * b_pad * S * V,
            transcendentals=b_pad * S,
            bytes_accessed=(b_pad * S * V + b_pad * V + V) * itemsize,
        ),
    )(x, w_eff)

    return out if b_pad == B else out[:B]


def init_params(key, value_size, attention_size):
    """Deterministic init mirroring the PyTorch module's parameter shapes."""
    k_ctx, k_w, k_b = jax.random.split(key, 3)
    bound_ctx = math.sqrt(6.0 / (attention_size + 1))        # xavier_uniform (A, 1)
    context = jax.random.uniform(k_ctx, (attention_size, 1), jnp.float32,
                                 -bound_ctx, bound_ctx)
    bound_w = 1.0 / math.sqrt(value_size)                     # nn.Linear default
    weight = jax.random.uniform(k_w, (attention_size, value_size), jnp.float32,
                                -bound_w, bound_w)
    bias = jax.random.uniform(k_b, (attention_size,), jnp.float32,
                              -bound_w, bound_w)
    return weight, bias, context


def reference(x, weight, bias, context):
    """Pure-JAX reference of the PyTorch forward."""
    t = jnp.einsum("bsv,av->bsa", x, weight) + bias
    vu = jnp.einsum("bsa,ao->bs", t, context)
    score = jax.nn.softmax(vu, axis=-1)
    return jnp.sum(x * score[..., None], axis=-2)


if __name__ == "__main__":
    B, S, V, A = 2, 8, 32, 16   # batch, seq, value_size, attention_size

    key = jax.random.PRNGKey(0)
    k_x, k_p, k_x2 = jax.random.split(key, 3)
    x = jax.random.normal(k_x, (B, S, V), jnp.float32)
    weight, bias, context = init_params(k_p, V, A)

    out = jax.block_until_ready(dot_product_attention(x, weight, bias, context))
    ref = reference(x, weight, bias, context)
    assert out.shape == (B, V), out.shape
    assert jnp.allclose(out, ref, atol=1e-4, rtol=1e-4), (
        f"max err {jnp.max(jnp.abs(out - ref))}")

    # Exercise the padded / multi-step-grid path on a non-divisor batch size.
    B2 = 13
    x2 = jax.random.normal(k_x2, (B2, S, V), jnp.float32)
    out2 = jax.block_until_ready(dot_product_attention(x2, weight, bias, context))
    ref2 = reference(x2, weight, bias, context)
    assert out2.shape == (B2, V), out2.shape
    assert jnp.allclose(out2, ref2, atol=1e-4, rtol=1e-4), (
        f"max err {jnp.max(jnp.abs(out2 - ref2))}")

    print("KERNEL_OK")
</pallas_src>

<mosaic_0001>
module attributes {stable_mosaic.version = 11 : i64} {
  func.func @_attention_kernel(%arg0: i32, %arg1: memref<2x8x32xf32, #tpu.memory_space<vmem>>, %arg2: memref<1x32xf32, #tpu.memory_space<vmem>>, %arg3: memref<2x32xf32, #tpu.memory_space<vmem>>) attributes {dimension_semantics = [#tpu.dimension_semantics<parallel>], iteration_bounds = array<i64: 1>, scalar_prefetch = 0 : i64, scratch_operands = 0 : i64, tpu.core_type = #tpu.core_type<tc>, window_params = [{transform_indices = @transform_0, window_bounds = array<i64: 2, 8, 32>}, {pipeline_mode = #tpu.pipeline_mode<synchronous>, transform_indices = @transform_1, window_bounds = array<i64: 1, 32>}, {transform_indices = @transform_2, window_bounds = array<i64: 2, 32>}]} {
    %c0 = arith.constant 0 : index
    %c0_0 = arith.constant 0 : index
    %c0_1 = arith.constant 0 : index
    %0 = vector.load %arg1[%c0, %c0_0, %c0_1] : memref<2x8x32xf32, #tpu.memory_space<vmem>>, vector<2x8x32xf32>
    %c0_2 = arith.constant 0 : index
    %c0_3 = arith.constant 0 : index
    %1 = vector.load %arg2[%c0_2, %c0_3] : memref<1x32xf32, #tpu.memory_space<vmem>>, vector<1x32xf32>
    %2 = vector.shape_cast %1 : vector<1x32xf32> to vector<1x1x32xf32>
    %3 = vector.broadcast %2 : vector<1x1x32xf32> to vector<2x8x32xf32>
    %4 = arith.mulf %0, %3 : vector<2x8x32xf32>
    %cst = arith.constant dense<0.000000e+00> : vector<2x8xf32>
    %5 = vector.multi_reduction <add>, %4, %cst [2] : vector<2x8x32xf32> to vector<2x8xf32>
    %cst_4 = arith.constant dense<0xFF800000> : vector<2xf32>
    %6 = vector.multi_reduction <maximumf>, %5, %cst_4 [1] : vector<2x8xf32> to vector<2xf32>
    %7 = vector.shape_cast %6 : vector<2xf32> to vector<2x1xf32>
    %8 = vector.broadcast %7 : vector<2x1xf32> to vector<2x8xf32>
    %9 = arith.subf %5, %8 : vector<2x8xf32>
    %10 = math.exp %9 : vector<2x8xf32>
    %cst_5 = arith.constant dense<0.000000e+00> : vector<2xf32>
    %11 = vector.multi_reduction <add>, %10, %cst_5 [1] : vector<2x8xf32> to vector<2xf32>
    %12 = vector.shape_cast %11 : vector<2xf32> to vector<2x1xf32>
    %13 = vector.shape_cast %10 : vector<2x8xf32> to vector<2x8x1xf32>
    %14 = vector.broadcast %13 : vector<2x8x1xf32> to vector<2x8x32xf32>
    %15 = arith.mulf %14, %0 : vector<2x8x32xf32>
    %cst_6 = arith.constant dense<0.000000e+00> : vector<2x32xf32>
    %16 = vector.multi_reduction <add>, %15, %cst_6 [1] : vector<2x8x32xf32> to vector<2x32xf32>
    %17 = vector.broadcast %12 : vector<2x1xf32> to vector<2x32xf32>
    %18 = arith.divf %16, %17 : vector<2x32xf32>
    %c0_7 = arith.constant 0 : index
    %c0_8 = arith.constant 0 : index
    %19 = vector.load %arg3[%c0_7, %c0_8] : memref<2x32xf32, #tpu.memory_space<vmem>>, vector<2x32xf32>
    tpu.vector_store %arg3[%c0_7, %c0_8], %18 {strides = array<i32>} : memref<2x32xf32, #tpu.memory_space<vmem>>, vector<2x32xf32>,
    return
  }
  func.func @transform_0(%arg0: i32) -> (i32, i32, i32) {
    %c0_i32 = arith.constant 0 : i32
    %c0_i32_0 = arith.constant 0 : i32
    %c0_i32_1 = arith.constant 0 : i32
    return %arg0, %c0_i32, %c0_i32_0 : i32, i32, i32
  }
  func.func @transform_1(%arg0: i32) -> (i32, i32) {
    %c0_i32 = arith.constant 0 : i32
    %c0_i32_0 = arith.constant 0 : i32
    %c0_i32_1 = arith.constant 0 : i32
    return %c0_i32, %c0_i32_0 : i32, i32
  }
  func.func @transform_2(%arg0: i32) -> (i32, i32) {
    %c0_i32 = arith.constant 0 : i32
    %c0_i32_0 = arith.constant 0 : i32
    return %arg0, %c0_i32 : i32, i32
  }
}

</mosaic_0001>

<llo_original>
// kernel: tpu_custom_call.1
$region0: #{tpu_custom_call.1}
  #allocation0 [shape = 'u32[]', space=smem, size = 0x4, offset = 0x4, fixed_abs, tag = 'smem constant byte address 0x4 - core index']
  #allocation1 [shape = 'u32[144,128]{1,0:T(1,128)}', space=vmem, size = 0x12000, scoped, tag = 'internal scratch']
  %s0 = inlined_call_operand.hbm [shape: f32[2,8,32], index: 0, kind: input, shape index: {}]
  %s1 = inlined_call_operand.vmem [shape: f32[1,32], index: 1, kind: input, shape index: {}]
  %s2 = inlined_call_operand.hbm [shape: f32[2,32], index: 2, kind: output, shape index: {}]
  %s3 = sld [smem:[#allocation0]]
  $region22: #{tpu_custom_call.1} parent=0
    _
  %s5 = ssub.s32 1, %s3
  %s6 = scalar_select 0, %s5, %s3
  $region1: #{tpu_custom_call.1} parent=0
    #allocation2 [shape = 'u8[8192]{0}', space=vmem, size = 0x2000, scoped, tag = 'input window, operand 0, single buffered']
    #allocation3 [shape = 's32[1]{0}', space=sflag, size = 0x4, scoped, tag = 'scoped memory for tpu_custom_call.1']
    #allocation4 [shape = 's32[1]{0}', space=sflag, size = 0x4, scoped, tag = 'scoped memory for tpu_custom_call.1']
    #allocation5 [shape = 'u8[1024]{0}', space=vmem, size = 0x400, scoped, tag = 'output window, operand 0, single buffered']
    %7 = vsyncpa [#allocation3], 0
    %8 = vsyncpa [#allocation4], 0
    // Predicated region
    $region2: #{tpu_custom_call.1} parent=1 // pred_check
      _
    $region3: #{tpu_custom_call.1} parent=1 // pred_check_branch
      %10 = sbr.rel (0) target = $region5
    $region4: #{tpu_custom_call.1} parent=1 // pred_region
      %s12 = ssub.s32 256, 256
      %13 = vsyncadd [#allocation3], %s12
      %s14 = sshll.u32 [#allocation2], 4
      %s15 = int_to_ptr.vmem [resolvable:$true] %s14
      %20 = dma.hbm_to_vmem [thread:$0]  %s0, 256, %s15, [#allocation3], 128, 128, 8
    $region5: #{tpu_custom_call.1} parent=1 // pred_fallthru
      _
    // Predicated region
    $region6: #{tpu_custom_call.1} parent=1 // pred_check
      _
    $region7: #{tpu_custom_call.1} parent=1 // pred_check_branch
      %22 = sbr.rel (0) target = $region9
    $region8: #{tpu_custom_call.1} parent=1 // pred_region
      _
    $region9: #{tpu_custom_call.1} parent=1 // pred_fallthru
      _
    // Predicated region
    $region10: #{tpu_custom_call.1} parent=1 // pred_check
      _
    $region11: #{tpu_custom_call.1} parent=1 // pred_check_branch
      %24 = sbr.rel (0) target = $region13
    $region12: #{tpu_custom_call.1} parent=1 // pred_region
      %25 = dma.done [#allocation3], 256
    $region13: #{tpu_custom_call.1} parent=1 // pred_fallthru
      _
    %v26 = vld [vmem:[#allocation2] sm:$0xff]
    %v27 = vld [vmem:[#allocation2 + $0x8] sm:$0xff]
    %v28 = vld [vmem:[%s1] sm:$0x1]
    %v30 = vlaneseq
    %v31 = vshrl.u32 %v30, 7
    %v32 = vsub.s32 0, %v31
    %v33 = vrot.slane %v28, %v32
    %v35 = vmul.f32 %v26, %v33
    %v36 = vmul.f32 %v27, %v33
    %vm37 = vcmask 261120
    %v38 = vsel %vm37, %v35, 0.0
    %39 = vadd.xlane.f32.xlu0 %v38
    %v40 = vpop.xlane.xlu0 %39
    %v41 = vsel %vm37, %v36, 0.0
    %42 = vadd.xlane.f32.xlu0 %v41
    %v43 = vpop.xlane.xlu0 %42
    %v46 = vlaneseq
    %v47 = vand.u32 %v46, 127
    %v48 = vlaneseq
    %v49 = vshrl.u32 %v48, 7
    %v50 = vsub.s32 %v47, %v49
    %v51 = vrot.slane %v40, %v50
    %v52 = vlaneseq
    %v53 = vshrl.u32 %v52, 7
    %v54 = vsub.s32 %v47, %v53
    %v55 = vrot.slane %v43, %v54
    %vm56 = vcmask 1041409
    %v57 = vsel %vm56, %v55, %v51
    %vm59 = vcmask 58368
    %v60 = vsel %vm59, %v57, -inf
    %61 = vmax.xlane.f32.xlu0 %v60
    %v62 = vpop.xlane.xlu0 %61
    %v64 = vlaneseq
    %v65 = vshrl.u32 %v64, 7
    %v66 = vsub.s32 0, %v65
    %v67 = vrot.slane %v62, %v66
    %v68 = vlaneseq
    %v69 = vshrl.u32 %v68, 7
    %v70 = vsub.s32 1, %v69
    %v71 = vrot.slane %v62, %v70
    %v74 = vsub.f32 %v40, %v67
    %v75 = vsub.f32 %v43, %v71
    %v76 = vmul.f32 %v74, 1.442695
    %v77 = vpow.pop %v76
    %v78 = vmul.f32 %v75, 1.442695
    %v79 = vpow.pop %v78
    %82 = vset.pattern.permute.xlu0 0
    %83 = vperm.xlu0 %82, %v77
    %v84 = vpop.permute.xlu0 %83
    %85 = vset.pattern.permute.xlu0 0
    %86 = vperm.xlu0 %85, %v79
    %v87 = vpop.permute.xlu0 %86
    %v88 = vlaneseq
    %v89 = vshrl.u32 %v88, 7
    %v90 = vsub.s32 %v47, %v89
    %v91 = vrot.slane %v84, %v90
    %v92 = vlaneseq
    %v93 = vshrl.u32 %v92, 7
    %v94 = vsub.s32 %v47, %v93
    %v95 = vrot.slane %v87, %v94
    %v96 = vsel %vm56, %v95, %v91
    %v98 = vsel %vm59, %v96, 0.0
    %99 = vadd.xlane.f32.xlu0 %v98
    %v100 = vpop.xlane.xlu0 %99
    %v103 = vmul.f32 %v84, %v26
    %v104 = vmul.f32 %v87, %v27
    %v105 = vsel %vm37, %v103, 0.0
    %v106 = vrot.slane %v105, 4
    %v107 = vadd.f32 %v105, %v106
    %v108 = vrot.slane %v107, 2
    %v109 = vadd.f32 %v107, %v108
    %v110 = vrot.slane %v109, 1
    %v111 = vadd.f32 %v109, %v110
    %v112 = vsel %vm37, %v104, 0.0
    %v113 = vrot.slane %v112, 4
    %v114 = vadd.f32 %v112, %v113
    %v115 = vrot.slane %v114, 2
    %v116 = vadd.f32 %v114, %v115
    %v117 = vrot.slane %v116, 1
    %v118 = vadd.f32 %v116, %v117
    %v120 = vrot.slane %v100, 1
    %v123 = vrcp.pop %v100
    %v124 = vmul.f32 %v111, %v123
    %v125 = vrcp.pop %v120
    %v126 = vmul.f32 %v118, %v125
    %v129 = vrot.slane %v126, 7
    %v130 = vsel %vm56, %v129, %v124
    %vm132 = vcmask 254976
    %133 = vst.msk [vmem:[#allocation5] sm:$0x3] %vm132, %v130
    // Predicated region
    $region14: #{tpu_custom_call.1} parent=1 // pred_check
      _
    $region15: #{tpu_custom_call.1} parent=1 // pred_check_branch
      %135 = sbr.rel (0) target = $region17
    $region16: #{tpu_custom_call.1} parent=1 // pred_region
      %s137 = ssub.s32 32, 32
      %138 = vsyncadd [#allocation4], %s137
      %s140 = sshll.u32 [#allocation5], 4
      %s141 = int_to_ptr.vmem [resolvable:$true] %s140
      %143 = dma.vmem_to_hbm [thread:$0]  %s141, 32, %s2, [#allocation4]
    $region17: #{tpu_custom_call.1} parent=1 // pred_fallthru
      _
    // Predicated region
    $region18: #{tpu_custom_call.1} parent=1 // pred_check
      _
    $region19: #{tpu_custom_call.1} parent=1 // pred_check_branch
      %145 = sbr.rel (0) target = $region21
    $region20: #{tpu_custom_call.1} parent=1 // pred_region
      %146 = dma.done [#allocation4], 32
    $region21: #{tpu_custom_call.1} parent=1 // pred_fallthru
      _
    %147 = vsyncpa [#allocation3], 1
    %148 = vsyncpa [#allocation4], 1

</llo_original>
